<compile_context>
chip_gen: v6e
topology: v6e:2x2x1
jax: 0.10.0
libtpu: 0.0.40
codegen_flags: <defaults>
</compile_context>

<pallas_src>
import functools

import numpy as np

import jax
import jax.numpy as jnp
from jax.experimental import pallas as pl
from jax.experimental.pallas import tpu as pltpu

SELU_ALPHA = 1.6732632423543772
SELU_SCALE = 1.0507009873554805


def _selu(x):
    # scale * (max(x,0) + alpha*(exp(min(x,0)) - 1))  -- exact & overflow-safe
    neg = SELU_ALPHA * (jnp.exp(jnp.minimum(x, 0.0)) - 1.0)
    return SELU_SCALE * jnp.where(x > 0, x, neg)


def _graph_agg_kernel(x_ref,    # VMEM (1, T, n_blk, Q*I)  gathered neighbors (compute dtype)
                      w1_ref,   # VMEM (Q*I, H*I)  kron(agg_weights, I) -> all-head aggregation
                      w2_ref,   # VMEM (H*I, H*O)  blockdiag_h(out_fc.weight.T)
                      b_ref,    # VMEM (1, H*O)    out_fc bias tiled per head (f32)
                      o_ref,    # VMEM (1, T, n_blk, H*O)  output (f32), lane-dense
                      *, alpha):
    _, T, n_blk, QI = x_ref.shape
    HO = o_ref.shape[-1]

    # ---- neighborhood aggregation for ALL heads in one MXU matmul (f32 acc)
    x2d = x_ref[0].reshape(T * n_blk, QI)
    agg = jnp.dot(x2d, w1_ref[...], preferred_element_type=jnp.float32)  # (M, H*I)

    # ---- swish2 (SELU) in f32, then out_fc batched across heads (MXU)
    act = _selu(agg).astype(w2_ref.dtype)
    y = jnp.dot(act, w2_ref[...], preferred_element_type=jnp.float32) + b_ref[...]

    # ---- temporal smoothing along T (non-recursive, matches torch in-place
    #      assignment), final SELU, single lane-dense store.
    y = y.reshape(T, n_blk, HO)
    y_prev = jnp.concatenate([y[:1], y[:-1]], axis=0)
    t_idx = jax.lax.broadcasted_iota(jnp.int32, (T, n_blk, HO), 0)
    y_sm = jnp.where(t_idx == 0, y, (1.0 - alpha) * y + alpha * y_prev)
    o_ref[0] = _selu(y_sm).astype(o_ref.dtype)


def _pick_node_block(n_nodes, max_block=128):
    if n_nodes <= max_block:
        return n_nodes
    for nb in range(max_block, 7, -1):
        if n_nodes % nb == 0 and nb % 8 == 0:
            return nb
    return n_nodes  # fall back to the full (always-legal) axis


def graph_aggregation_forward(x, nearest_nodes, agg_weights, out_w, out_b, *,
                              alpha=0.2, compute_dtype=jnp.bfloat16,
                              node_block=None):
    """x: (B, T, n_nodes, in_heads, n_in) float32
       nearest_nodes: (n_nodes, k+1) int32, values in [0, n_nodes] (n_nodes = zero pad)
       agg_weights: (k+1, in_heads, n_heads)
       out_w: (n_out, n_in) (torch Linear layout), out_b: (n_out,)
       returns: (B, T, n_nodes, n_heads, n_out) float32
    """
    B, T, n_nodes, in_heads, n_in = x.shape
    kp1 = nearest_nodes.shape[1]
    n_heads = agg_weights.shape[-1]
    n_out = out_w.shape[0]
    Q = kp1 * in_heads
    QI, HI, HO = Q * n_in, n_heads * n_in, n_heads * n_out

    # ---- neighborhood gather (wrapper glue).
    # TODO(synk): move this gather into the kernel (scalar-prefetched
    # nearest_nodes + per-block DMA gather) to avoid the (k+1)*in_heads HBM
    # blow-up at large graph sizes.
    pad = jnp.zeros((B, T, 1, in_heads, n_in), x.dtype)
    pad_x = jnp.concatenate([x, pad], axis=2)
    x_nn = pad_x[:, :, nearest_nodes.reshape(-1)]                 # (B,T,N*kp1,Hin,I)
    x_nn = x_nn.reshape(B, T, n_nodes, QI).astype(compute_dtype)  # (B,T,N,Q*I) bf16

    # W1[q*I+i', h*I+i] = agg_weights[q,h] * (i==i')  -> aggregation, all heads
    w_agg = agg_weights.reshape(Q, n_heads).astype(jnp.float32)
    w1 = jnp.kron(w_agg, jnp.eye(n_in, dtype=jnp.float32)).astype(compute_dtype)
    # W2 = blockdiag_h(out_w.T): (H*I, H*O); bias tiled per head
    w2 = jnp.kron(jnp.eye(n_heads, dtype=jnp.float32),
                  out_w.T.astype(jnp.float32)).astype(compute_dtype)
    b2 = jnp.tile(out_b.astype(jnp.float32), n_heads).reshape(1, HO)

    n_blk = node_block if node_block is not None else _pick_node_block(n_nodes)
    assert n_nodes % n_blk == 0, (n_nodes, n_blk)
    assert n_blk % 8 == 0 or n_blk == n_nodes, n_blk
    grid = (B, n_nodes // n_blk)

    # Scoped-VMEM budget: generous estimate, capped at 32 MiB so it is safe on
    # v5e/v6e (128 MiB physical) and v7x (64 MiB per TensorCore).
    isz = jnp.dtype(compute_dtype).itemsize
    x_blk_b = T * n_blk * QI * isz
    o_blk_b = T * n_blk * HO * 4
    w_b = QI * HI * isz + HI * HO * isz + HO * 4
    inter_b = 4 * T * n_blk * (HI + 2 * HO) * 4
    est = 2 * (x_blk_b + o_blk_b) + 2 * w_b + inter_b + (4 << 20)
    vmem_limit = int(min(max(est, 16 << 20), 32 << 20))

    kernel = functools.partial(_graph_agg_kernel, alpha=float(alpha))
    out = pl.pallas_call(
        kernel,
        out_shape=jax.ShapeDtypeStruct((B, T, n_nodes, HO), jnp.float32),
        grid=grid,
        in_specs=[
            pl.BlockSpec((1, T, n_blk, QI), lambda b, nb: (b, 0, nb, 0)),
            pl.BlockSpec((QI, HI), lambda b, nb: (0, 0)),
            pl.BlockSpec((HI, HO), lambda b, nb: (0, 0)),
            pl.BlockSpec((1, HO), lambda b, nb: (0, 0)),
        ],
        out_specs=pl.BlockSpec((1, T, n_blk, HO), lambda b, nb: (b, 0, nb, 0)),
        compiler_params=pltpu.CompilerParams(
            dimension_semantics=("parallel", "parallel"),
            vmem_limit_bytes=vmem_limit),
    )(x_nn, w1, w2, b2)

    # (B, T, N, H*O) -> (B, T, N, H, O): pure reshape, no transpose needed.
    return out.reshape(B, T, n_nodes, n_heads, n_out)


def reference_forward(x, nearest_nodes, agg_weights, out_w, out_b, *,
                      alpha=0.2, compute_dtype=jnp.float32):
    """Pure-JAX reference mirroring the PyTorch forward (and the kernel's
    bf16-input / f32-accumulate casts when compute_dtype=bfloat16)."""
    B, T, n_nodes, in_heads, n_in = x.shape
    kp1 = nearest_nodes.shape[1]
    pad = jnp.zeros((B, T, 1, in_heads, n_in), x.dtype)
    pad_x = jnp.concatenate([x, pad], axis=2)
    x_nn = pad_x[:, :, nearest_nodes.reshape(-1)].reshape(
        B, T, n_nodes, kp1, in_heads, n_in).astype(compute_dtype)
    x_agg = jnp.einsum('btnkji,kjh->btnhi', x_nn,
                       agg_weights.astype(compute_dtype),
                       preferred_element_type=jnp.float32)
    act = _selu(x_agg).astype(compute_dtype)
    y = jnp.einsum('btnhi,oi->btnho', act, out_w.astype(compute_dtype),
                   preferred_element_type=jnp.float32)
    y = y + out_b.astype(jnp.float32)
    y = y.at[:, 1:].set((1.0 - alpha) * y[:, 1:] + alpha * y[:, :-1])
    return _selu(y)


if __name__ == "__main__":
    # Small, deterministic problem sizes
    B, T, n_nodes, k = 2, 8, 32, 3          # k+1 = 4 neighbors (incl. self)
    in_heads, n_heads = 2, 4
    n_in, n_out = 32, 32                    # H*O = 128 -> lane-dense output
    alpha = 0.2

    key = jax.random.PRNGKey(0)
    kx, ka, kw, kb = jax.random.split(key, 4)

    x = jax.random.normal(kx, (B, T, n_nodes, in_heads, n_in), dtype=jnp.float32)

    # deterministic neighbor index table (values in [0, n_nodes]; n_nodes = zero pad)
    nn_idx = np.zeros((n_nodes, k + 1), dtype=np.int32)
    for n in range(n_nodes):
        nn_idx[n, 0] = n
        for j in range(1, k + 1):
            nn_idx[n, j] = (n + j) % n_nodes
    nn_idx[::4, -1] = n_nodes            # exercise the zero-padding slot
    nearest_nodes = jnp.asarray(nn_idx)

    # parameters (deterministic synthetic init; shapes from __init__)
    agg_weights = jax.random.normal(ka, (k + 1, in_heads, n_heads),
                                    dtype=jnp.float32)            # torch.randn
    bound = 1.0 / np.sqrt(n_in)
    out_w = jax.random.uniform(kw, (n_out, n_in), minval=-bound, maxval=bound,
                               dtype=jnp.float32)                 # nn.Linear weight
    out_b = jax.random.uniform(kb, (n_out,), minval=-bound, maxval=bound,
                               dtype=jnp.float32)                 # nn.Linear bias

    out = graph_aggregation_forward(x, nearest_nodes, agg_weights, out_w, out_b,
                                    alpha=alpha, compute_dtype=jnp.bfloat16,
                                    node_block=16)   # 2 node blocks -> grid (2, 2)
    out = jax.block_until_ready(out)

    ref = reference_forward(x, nearest_nodes, agg_weights, out_w, out_b,
                            alpha=alpha, compute_dtype=jnp.bfloat16)
    ref = jax.block_until_ready(ref)

    assert out.shape == (B, T, n_nodes, n_heads, n_out), out.shape
    np.testing.assert_allclose(np.asarray(out, dtype=np.float32),
                               np.asarray(ref, dtype=np.float32),
                               rtol=1e-2, atol=1e-2)
    print("KERNEL_OK")
</pallas_src>

<mosaic_0001>
module attributes {stable_mosaic.version = 11 : i64} {
  func.func @_graph_agg_kernel(%arg0: i32, %arg1: i32, %arg2: memref<1x8x16x256xbf16, #tpu.memory_space<vmem>>, %arg3: memref<256x128xbf16, #tpu.memory_space<vmem>>, %arg4: memref<128x128xbf16, #tpu.memory_space<vmem>>, %arg5: memref<1x128xf32, #tpu.memory_space<vmem>>, %arg6: memref<1x8x16x128xf32, #tpu.memory_space<vmem>>) attributes {dimension_semantics = [#tpu.dimension_semantics<parallel>, #tpu.dimension_semantics<parallel>], iteration_bounds = array<i64: 2, 2>, scalar_prefetch = 0 : i64, scratch_operands = 0 : i64, tpu.core_type = #tpu.core_type<tc>, window_params = [{transform_indices = @transform_0, window_bounds = array<i64: 1, 8, 16, 256>}, {pipeline_mode = #tpu.pipeline_mode<synchronous>, transform_indices = @transform_1, window_bounds = array<i64: 256, 128>}, {pipeline_mode = #tpu.pipeline_mode<synchronous>, transform_indices = @transform_2, window_bounds = array<i64: 128, 128>}, {pipeline_mode = #tpu.pipeline_mode<synchronous>, transform_indices = @transform_3, window_bounds = array<i64: 1, 128>}, {transform_indices = @transform_4, window_bounds = array<i64: 1, 8, 16, 128>}]} {
    %c0 = arith.constant 0 : index
    %c0_0 = arith.constant 0 : index
    %c0_1 = arith.constant 0 : index
    %c0_2 = arith.constant 0 : index
    %0 = vector.load %arg2[%c0, %c0_0, %c0_1, %c0_2] : memref<1x8x16x256xbf16, #tpu.memory_space<vmem>>, vector<1x8x16x256xbf16>
    %1 = vector.shape_cast %0 : vector<1x8x16x256xbf16> to vector<8x16x256xbf16>
    %2 = vector.shape_cast %1 : vector<8x16x256xbf16> to vector<128x256xbf16>
    %c0_3 = arith.constant 0 : index
    %c0_4 = arith.constant 0 : index
    %3 = vector.load %arg3[%c0_3, %c0_4] : memref<256x128xbf16, #tpu.memory_space<vmem>>, vector<256x128xbf16>
    %cst = arith.constant dense<0.000000e+00> : vector<128x128xf32>
    %4 = tpu.matmul %2, %3, %cst {dimension_numbers = #tpu.dot_dimension_numbers<[1], [0], [0], [1], [0, 0, 1, 1], [], []>} : vector<128x256xbf16>, vector<256x128xbf16>, vector<128x128xf32> -> vector<128x128xf32>
    %cst_5 = arith.constant 0.000000e+00 : f32
    %5 = vector.broadcast %cst_5 : f32 to vector<128x128xf32>
    %6 = arith.minimumf %4, %5 : vector<128x128xf32>
    %7 = math.exp %6 : vector<128x128xf32>
    %cst_6 = arith.constant 1.000000e+00 : f32
    %8 = vector.broadcast %cst_6 : f32 to vector<128x128xf32>
    %9 = arith.subf %7, %8 : vector<128x128xf32>
    %cst_7 = arith.constant 1.67326319 : f32
    %10 = vector.broadcast %cst_7 : f32 to vector<128x128xf32>
    %11 = arith.mulf %10, %9 : vector<128x128xf32>
    %cst_8 = arith.constant 0.000000e+00 : f32
    %12 = vector.broadcast %cst_8 : f32 to vector<128x128xf32>
    %13 = arith.cmpf ogt, %4, %12 : vector<128x128xf32>
    %14 = arith.select %13, %4, %11 : vector<128x128xi1>, vector<128x128xf32>
    %cst_9 = arith.constant 1.05070102 : f32
    %15 = vector.broadcast %cst_9 : f32 to vector<128x128xf32>
    %16 = arith.mulf %15, %14 : vector<128x128xf32>
    %17 = arith.truncf %16 : vector<128x128xf32> to vector<128x128xbf16>
    %c0_10 = arith.constant 0 : index
    %c0_11 = arith.constant 0 : index
    %18 = vector.load %arg4[%c0_10, %c0_11] : memref<128x128xbf16, #tpu.memory_space<vmem>>, vector<128x128xbf16>
    %cst_12 = arith.constant dense<0.000000e+00> : vector<128x128xf32>
    %19 = tpu.matmul %17, %18, %cst_12 {dimension_numbers = #tpu.dot_dimension_numbers<[1], [0], [0], [1], [0, 0, 1, 1], [], []>} : vector<128x128xbf16>, vector<128x128xbf16>, vector<128x128xf32> -> vector<128x128xf32>
    %c0_13 = arith.constant 0 : index
    %c0_14 = arith.constant 0 : index
    %20 = vector.load %arg5[%c0_13, %c0_14] : memref<1x128xf32, #tpu.memory_space<vmem>>, vector<1x128xf32>
    %21 = vector.broadcast %20 : vector<1x128xf32> to vector<128x128xf32>
    %22 = arith.addf %19, %21 : vector<128x128xf32>
    %23 = vector.shape_cast %22 : vector<128x128xf32> to vector<8x16x128xf32>
    %24 = vector.extract_strided_slice %23 {offsets = [0, 0, 0], sizes = [1, 16, 128], strides = [1, 1, 1]} : vector<8x16x128xf32> to vector<1x16x128xf32>
    %25 = vector.extract_strided_slice %23 {offsets = [0, 0, 0], sizes = [7, 16, 128], strides = [1, 1, 1]} : vector<8x16x128xf32> to vector<7x16x128xf32>
    %26 = tpu.concatenate %24, %25 in 0 : vector<1x16x128xf32>, vector<7x16x128xf32> -> vector<8x16x128xf32>
    %27 = tpu.iota {dimensions = array<i32: 0>} : vector<8x16x128xi32>
    %c0_i32 = arith.constant 0 : i32
    %28 = vector.broadcast %c0_i32 : i32 to vector<8x16x128xi32>
    %29 = arith.cmpi eq, %27, %28 : vector<8x16x128xi32>
    %cst_15 = arith.constant 8.000000e-01 : f32
    %30 = vector.broadcast %cst_15 : f32 to vector<8x16x128xf32>
    %31 = arith.mulf %30, %23 : vector<8x16x128xf32>
    %cst_16 = arith.constant 2.000000e-01 : f32
    %32 = vector.broadcast %cst_16 : f32 to vector<8x16x128xf32>
    %33 = arith.mulf %32, %26 : vector<8x16x128xf32>
    %34 = arith.addf %31, %33 : vector<8x16x128xf32>
    %35 = arith.select %29, %23, %34 : vector<8x16x128xi1>, vector<8x16x128xf32>
    %cst_17 = arith.constant 0.000000e+00 : f32
    %36 = vector.broadcast %cst_17 : f32 to vector<8x16x128xf32>
    %37 = arith.minimumf %35, %36 : vector<8x16x128xf32>
    %38 = math.exp %37 : vector<8x16x128xf32>
    %cst_18 = arith.constant 1.000000e+00 : f32
    %39 = vector.broadcast %cst_18 : f32 to vector<8x16x128xf32>
    %40 = arith.subf %38, %39 : vector<8x16x128xf32>
    %cst_19 = arith.constant 1.67326319 : f32
    %41 = vector.broadcast %cst_19 : f32 to vector<8x16x128xf32>
    %42 = arith.mulf %41, %40 : vector<8x16x128xf32>
    %cst_20 = arith.constant 0.000000e+00 : f32
    %43 = vector.broadcast %cst_20 : f32 to vector<8x16x128xf32>
    %44 = arith.cmpf ogt, %35, %43 : vector<8x16x128xf32>
    %45 = arith.select %44, %35, %42 : vector<8x16x128xi1>, vector<8x16x128xf32>
    %cst_21 = arith.constant 1.05070102 : f32
    %46 = vector.broadcast %cst_21 : f32 to vector<8x16x128xf32>
    %47 = arith.mulf %46, %45 : vector<8x16x128xf32>
    %c0_22 = arith.constant 0 : index
    %c0_23 = arith.constant 0 : index
    %c0_24 = arith.constant 0 : index
    %c0_25 = arith.constant 0 : index
    %48 = vector.load %arg6[%c0_22, %c0_23, %c0_24, %c0_25] : memref<1x8x16x128xf32, #tpu.memory_space<vmem>>, vector<1x8x16x128xf32>
    %49 = vector.shape_cast %48 : vector<1x8x16x128xf32> to vector<8x16x128xf32>
    %50 = vector.shape_cast %47 : vector<8x16x128xf32> to vector<1x8x16x128xf32>
    tpu.vector_store %arg6[%c0_22, %c0_23, %c0_24, %c0_25], %50 {strides = array<i32>} : memref<1x8x16x128xf32, #tpu.memory_space<vmem>>, vector<1x8x16x128xf32>,
    return
  }
  func.func @transform_0(%arg0: i32, %arg1: i32) -> (i32, i32, i32, i32) {
    %c0_i32 = arith.constant 0 : i32
    %c0_i32_0 = arith.constant 0 : i32
    %c0_i32_1 = arith.constant 0 : i32
    return %arg0, %c0_i32, %arg1, %c0_i32_0 : i32, i32, i32, i32
  }
  func.func @transform_1(%arg0: i32, %arg1: i32) -> (i32, i32) {
    %c0_i32 = arith.constant 0 : i32
    %c0_i32_0 = arith.constant 0 : i32
    %c0_i32_1 = arith.constant 0 : i32
    return %c0_i32, %c0_i32_0 : i32, i32
  }
  func.func @transform_2(%arg0: i32, %arg1: i32) -> (i32, i32) {
    %c0_i32 = arith.constant 0 : i32
    %c0_i32_0 = arith.constant 0 : i32
    %c0_i32_1 = arith.constant 0 : i32
    return %c0_i32, %c0_i32_0 : i32, i32
  }
  func.func @transform_3(%arg0: i32, %arg1: i32) -> (i32, i32) {
    %c0_i32 = arith.constant 0 : i32
    %c0_i32_0 = arith.constant 0 : i32
    %c0_i32_1 = arith.constant 0 : i32
    return %c0_i32, %c0_i32_0 : i32, i32
  }
  func.func @transform_4(%arg0: i32, %arg1: i32) -> (i32, i32, i32, i32) {
    %c0_i32 = arith.constant 0 : i32
    %c0_i32_0 = arith.constant 0 : i32
    %c0_i32_1 = arith.constant 0 : i32
    return %arg0, %c0_i32, %arg1, %c0_i32_0 : i32, i32, i32, i32
  }
}

</mosaic_0001>

<llo_original>
// kernel: tpu_custom_call.1
$region0: #{tpu_custom_call.1}
  #allocation0 [shape = 'u32[]', space=smem, size = 0x4, offset = 0x4, fixed_abs, tag = 'smem constant byte address 0x4 - core index']
  #allocation1 [shape = 'u32[144,128]{1,0:T(1,128)}', space=vmem, size = 0x12000, scoped, tag = 'internal scratch']
  #allocation9 [shape = 's32[]', space=sflag, size = 0x4, offset = 0, fixed_abs, tag = 'sflag constant byte address 0x0 - dummy sync flag']
  #allocation11 [shape = 's32[]', space=sflag, size = 0x4, offset = 0, fixed_abs, tag = 'sflag constant byte address 0x0 - dummy sync flag']
  %s0 = inlined_call_operand.hbm [shape: bf16[2,8,32,256], index: 0, kind: input, shape index: {}]
  %s1 = inlined_call_operand.hbm [shape: bf16[256,128], index: 1, kind: input, shape index: {}]
  %s2 = inlined_call_operand.hbm [shape: bf16[128,128], index: 2, kind: input, shape index: {}]
  %s3 = inlined_call_operand.vmem [shape: f32[1,128], index: 3, kind: input, shape index: {}]
  %s4 = inlined_call_operand.hbm [shape: f32[2,8,32,128], index: 4, kind: output, shape index: {}]
  %s5 = sld [smem:[#allocation0]]
  $region61: #{tpu_custom_call.1} parent=0
    _
  %s7 = ssub.s32 1, %s5
  %s8 = scalar_select 0, %s7, %s5
  $region1: #{tpu_custom_call.1} parent=0
    #allocation2 [shape = 'u8[131072]{0}', space=vmem, size = 0x20000, scoped, tag = 'input window, operand 0']
    #allocation3 [shape = 's32[2]{0}', space=sflag, size = 0x8, scoped, tag = 'scoped memory for tpu_custom_call.1']
    #allocation4 [shape = 's32[2]{0}', space=sflag, size = 0x8, scoped, tag = 'scoped memory for tpu_custom_call.1']
    #allocation5 [shape = 'u8[65536]{0}', space=vmem, size = 0x10000, scoped, tag = 'input window, operand 1, single buffered']
    #allocation6 [shape = 's32[1]{0}', space=sflag, size = 0x4, scoped, tag = 'scoped memory for tpu_custom_call.1']
    #allocation7 [shape = 'u8[32768]{0}', space=vmem, size = 0x8000, scoped, tag = 'input window, operand 2, single buffered']
    #allocation8 [shape = 'u8[131072]{0}', space=vmem, size = 0x20000, scoped, tag = 'output window, operand 0']
    %9 = vsyncpa [#allocation3], 0
    %s10 = scalar_lea.sflag [#allocation3], 1
    %11 = vsyncpa %s10, 0
    %12 = vsyncpa [#allocation6], 0
    %13 = vsyncpa [#allocation4], 0
    %s14 = scalar_lea.sflag [#allocation4], 1
    %15 = vsyncpa %s14, 0
    loop: start=0, step=1, limit=6
    $region2: #{tpu_custom_call.1} parent=1 // loop_pre_header
      _
    $region3: #{tpu_custom_call.1} parent=1 // loop_header
      %s17 = sphi 0, %s21
      %p18 = scmp.ge.s32.totalorder %s17, 6
      %s24 = sphi 0, %s36
      %s25 = sphi 0, %s32
      %s26 = sphi 0, %s24
      %s27 = sphi 0, %s25
      %s28 = sphi 0, %s26
      %s29 = sphi 0, %s27
      %s41 = sphi 0, %s43
      %s44 = sphi 0, %s41
      %s45 = sphi 0, %s44
      %s61 = sphi 0, %s45
      %s65 = sphi 0, %s65
      %s67 = sphi 0, %s65
      %s68 = sphi 0, %s67
      %s82 = sphi 0, %s68
      %s86 = sphi 0, %s86
      %s88 = sphi 0, %s86
      %s89 = sphi 0, %s88
      %s103 = sphi 0, %s89
      %s107 = sphi 0, %s107
      %s109 = sphi 0, %s107
      %s110 = sphi 0, %s109
      %s124 = sphi 0, %s110
      %s132 = sphi 0, %s134
      %s135 = sphi 0, %s132
      %s136 = sphi 0, %s135
      %s152 = sphi 0, %s136
    $region4: #{tpu_custom_call.1} parent=1 // loop_header_branch
      %20 = sbr.rel (%p18) target = $region8
    $region5: #{tpu_custom_call.1} parent=1 // loop_body
      %s22 = ssub.s32 %s17, 1
      %s23 = ssub.s32 %s17, 2
      %s30 = sadd.s32 1, %s25
      %p31 = scmp.ge.s32.totalorder %s30, 2
      %s32 = scalar_select %p31, 0, %s30
      %s33 = sadd.s32 1, %s24
      %s34 = scalar_select %p31, %s33, %s24
      %p35 = scmp.ge.s32.totalorder %s34, 2
      %s36 = scalar_select %p35, 0, %s34
      %s37 = ssub.s32 %s24, %s36
      %s38 = ssub.s32 %s25, %s32
      %s39 = sor.u32 %s37, %s38
      %p40 = scmp.eq.s32.totalorder %s39, 0
      %s42 = sadd.s32 %s41, 1
      %s43 = scalar_select %p40, %s41, %s42
      %p46 = pneg %p40
      %p47 = scmp.eq.s32.totalorder %s17, 3
      %p48 = por %p46, %p47
      %p49 = scmp.ne.s32.totalorder %s41, %s44
      %p50 = scmp.eq.s32.totalorder %s17, 0
      %p51 = por %p49, %p50
      %p52 = scmp.ne.s32.totalorder %s41, %s44
      %p53 = scmp.eq.s32.totalorder %s22, 3
      %p54 = por %p52, %p53
      %p55 = scmp.ne.s32.totalorder %s44, %s45
      %p56 = scmp.eq.s32.totalorder %s22, 0
      %p57 = por %p55, %p56
      %p58 = scmp.ne.s32.totalorder %s44, %s45
      %p59 = scmp.eq.s32.totalorder %s23, 3
      %p60 = por %p58, %p59
      %p62 = scmp.ne.s32.totalorder %s45, %s61
      %p63 = scmp.eq.s32.totalorder %s23, 0
      %p64 = por %p62, %p63
      %s66 = sadd.s32 %s65, 1
      %p69 = scmp.eq.s32.totalorder %s17, 3
      %p70 = scmp.ne.s32.totalorder %s65, %s67
      %p71 = scmp.eq.s32.totalorder %s17, 0
      %p72 = por %p70, %p71
      %p73 = scmp.ne.s32.totalorder %s65, %s67
      %p74 = scmp.eq.s32.totalorder %s22, 3
      %p75 = por %p73, %p74
      %p76 = scmp.ne.s32.totalorder %s67, %s68
      %p77 = scmp.eq.s32.totalorder %s22, 0
      %p78 = por %p76, %p77
      %p79 = scmp.ne.s32.totalorder %s67, %s68
      %p80 = scmp.eq.s32.totalorder %s23, 3
      %p81 = por %p79, %p80
      %p83 = scmp.ne.s32.totalorder %s68, %s82
      %p84 = scmp.eq.s32.totalorder %s23, 0
      %p85 = por %p83, %p84
      %s87 = sadd.s32 %s86, 1
      %p90 = scmp.eq.s32.totalorder %s17, 3
      %p91 = scmp.ne.s32.totalorder %s86, %s88
      %p92 = scmp.eq.s32.totalorder %s17, 0
      %p93 = por %p91, %p92
      %p94 = scmp.ne.s32.totalorder %s86, %s88
      %p95 = scmp.eq.s32.totalorder %s22, 3
      %p96 = por %p94, %p95
      %p97 = scmp.ne.s32.totalorder %s88, %s89
      %p98 = scmp.eq.s32.totalorder %s22, 0
      %p99 = por %p97, %p98
      %p100 = scmp.ne.s32.totalorder %s88, %s89
      %p101 = scmp.eq.s32.totalorder %s23, 3
      %p102 = por %p100, %p101
      %p104 = scmp.ne.s32.totalorder %s89, %s103
      %p105 = scmp.eq.s32.totalorder %s23, 0
      %p106 = por %p104, %p105
      %s108 = sadd.s32 %s107, 1
      %p111 = scmp.eq.s32.totalorder %s17, 3
      %p112 = scmp.ne.s32.totalorder %s107, %s109
      %p113 = scmp.eq.s32.totalorder %s17, 0
      %p114 = por %p112, %p113
      %p115 = scmp.ne.s32.totalorder %s107, %s109
      %p116 = scmp.eq.s32.totalorder %s22, 3
      %p117 = por %p115, %p116
      %p118 = scmp.ne.s32.totalorder %s109, %s110
      %p119 = scmp.eq.s32.totalorder %s22, 0
      %p120 = por %p118, %p119
      %p121 = scmp.ne.s32.totalorder %s109, %s110
      %p122 = scmp.eq.s32.totalorder %s23, 3
      %p123 = por %p121, %p122
      %p125 = scmp.ne.s32.totalorder %s110, %s124
      %p126 = scmp.eq.s32.totalorder %s23, 0
      %p127 = por %p125, %p126
      %s128 = ssub.s32 %s24, %s36
      %s129 = ssub.s32 %s25, %s32
      %s130 = sor.u32 %s128, %s129
      %p131 = scmp.eq.s32.totalorder %s130, 0
      %s133 = sadd.s32 %s132, 1
      %s134 = scalar_select %p131, %s132, %s133
      %p137 = pneg %p131
      %p138 = scmp.eq.s32.totalorder %s17, 3
      %p139 = por %p137, %p138
      %p140 = scmp.ne.s32.totalorder %s132, %s135
      %p141 = scmp.eq.s32.totalorder %s17, 0
      %p142 = por %p140, %p141
      %p143 = scmp.ne.s32.totalorder %s132, %s135
      %p144 = scmp.eq.s32.totalorder %s22, 3
      %p145 = por %p143, %p144
      %p146 = scmp.ne.s32.totalorder %s135, %s136
      %p147 = scmp.eq.s32.totalorder %s22, 0
      %p148 = por %p146, %p147
      %p149 = scmp.ne.s32.totalorder %s135, %s136
      %p150 = scmp.eq.s32.totalorder %s23, 3
      %p151 = por %p149, %p150
      %p153 = scmp.ne.s32.totalorder %s136, %s152
      %p154 = scmp.eq.s32.totalorder %s23, 0
      %p155 = por %p153, %p154
      %p156 = scmp.le.s32.totalorder 1, %s17
      %p157 = scmp.lt.s32.totalorder %s17, 5
      %p158 = pnand %p156, %p157
      %p159 = pneg %p158
      // Predicated region
      $region9: #{tpu_custom_call.1} parent=5 // pred_check
        _
      $region10: #{tpu_custom_call.1} parent=5 // pred_check_branch
        %161 = sbr.rel (%p158) target = $region12
      $region11: #{tpu_custom_call.1} parent=5 // pred_region
        %s162 = ssub.s32 %s17, 1
        // Predicated region
        $region13: #{tpu_custom_call.1} parent=11 // pred_check
          %p163 = pneg %p78
        $region14: #{tpu_custom_call.1} parent=11 // pred_check_branch
          %165 = sbr.rel (%p163) target = $region16
        $region15: #{tpu_custom_call.1} parent=11 // pred_region
          %s167 = ssub.s32 2048, 2048
          %168 = vsyncadd [#allocation6], %s167
          %s169 = sshll.u32 [#allocation5], 4
          %s170 = int_to_ptr.vmem [resolvable:$true] %s169
          %175 = dma.hbm_to_vmem [thread:$0]  %s1, 2048, %s170, [#allocation6], 64, 64, 4
        $region16: #{tpu_custom_call.1} parent=11 // pred_fallthru
          _
        // Predicated region
        $region17: #{tpu_custom_call.1} parent=11 // pred_check
          %p176 = pneg %p99
        $region18: #{tpu_custom_call.1} parent=11 // pred_check_branch
          %178 = sbr.rel (%p176) target = $region20
        $region19: #{tpu_custom_call.1} parent=11 // pred_region
          %s180 = ssub.s32 1024, 1024
          %181 = vsyncadd [#allocation6], %s180
          %s182 = sshll.u32 [#allocation7], 4
          %s183 = int_to_ptr.vmem [resolvable:$true] %s182
          %188 = dma.hbm_to_vmem [thread:$0]  %s2, 1024, %s183, [#allocation6], 64, 64, 4
        $region20: #{tpu_custom_call.1} parent=11 // pred_fallthru
          _
        // Predicated region
        $region21: #{tpu_custom_call.1} parent=11 // pred_check
          %p189 = pneg %p120
        $region22: #{tpu_custom_call.1} parent=11 // pred_check_branch
          %191 = sbr.rel (%p189) target = $region24
        $region23: #{tpu_custom_call.1} parent=11 // pred_region
          _
        $region24: #{tpu_custom_call.1} parent=11 // pred_fallthru
          _
      $region12: #{tpu_custom_call.1} parent=5 // pred_fallthru
        _
      %p192 = scmp.lt.s32.totalorder %s17, 4
      // Predicated region
      $region25: #{tpu_custom_call.1} parent=5 // pred_check
        %p193 = pneg %p192
      $region26: #{tpu_custom_call.1} parent=5 // pred_check_branch
        %195 = sbr.rel (%p193) target = $region28
      $region27: #{tpu_custom_call.1} parent=5 // pred_region
        // Predicated region
        $region29: #{tpu_custom_call.1} parent=27 // pred_check
          %p196 = pneg %p51
        $region30: #{tpu_custom_call.1} parent=27 // pred_check_branch
          %198 = sbr.rel (%p196) target = $region32
        $region31: #{tpu_custom_call.1} parent=27 // pred_region
          #allocation10 [shape = 'u32[6]{0}', space=smem, size = 0x18, scoped, tag = 'DMA stride descriptor']
          %s199 = sand.u32 %s41, 1
          %s200 = scalar_lea.sflag [#allocation3], %s199
          %s201 = sand.u32 %s41, 1
          %s202 = smul.addr %s201, 128
          %s203 = scalar_lea.vmem [#allocation2], %s202
          %s204 = smul.u32 2, %s25
          %s206 = ssub.s32 2048, 2048
          %207 = vsyncadd %s200, %s206
          %s208 = smul.addr %s204, 2
          %s209 = smul.addr %s24, 64
          %s210 = sadd.s32 %s208, %s209
          %s211 = smul.addr %s210, 64
          %s212 = scalar_lea.hbm %s0, %s211
          %s214 = sshll.u32 1, 14
          %s215 = sxor.u32 4294967295, %s214
          %s217 = sld [smem:[#allocation0]]
          %s218 = sadd.s32 2, %s217
          %s220 = sshll.u32 7, 26
          %s221 = sxor.u32 4294967295, %s220
          %s222 = sand.u32 0, %s221
          %s223 = sshll.u32 %s218, 26
          %s224 = sor.u32 %s222, %s223
          %s225 = sshll.u32 %s203, 4
          %s226 = int_to_ptr.vmem [resolvable:$true] %s225
          %232 = sst [smem:[#allocation10]] 512
          %s233 = scalar_lea.smem [#allocation10], 1
          %234 = sst [smem:[%s233]] 256
          %s235 = scalar_lea.smem [#allocation10], 2
          %236 = sst [smem:[%s235]] 2
          %s237 = scalar_lea.smem [#allocation10], 3
          %238 = sst [smem:[%s237]] 128
          %s239 = scalar_lea.smem [#allocation10], 4
          %240 = sst [smem:[%s239]] 128
          %s241 = scalar_lea.smem [#allocation10], 5
          %242 = sst [smem:[%s241]] 8
          %244 = dma.general %s212, 2048, %s226, %s200, 131072, [#allocation10], %s224, 0
        $region32: #{tpu_custom_call.1} parent=27 // pred_fallthru
          _
      $region28: #{tpu_custom_call.1} parent=5 // pred_fallthru
        _
      %p245 = scmp.le.s32.totalorder 1, %s17
      %p246 = scmp.lt.s32.totalorder %s17, 5
      %p247 = pnand %p245, %p246
      %p248 = pneg %p247
      // Predicated region
      $region33: #{tpu_custom_call.1} parent=5 // pred_check
        _
      $region34: #{tpu_custom_call.1} parent=5 // pred_check_branch
        %250 = sbr.rel (%p247) target = $region36
      $region35: #{tpu_custom_call.1} parent=5 // pred_region
        %s251 = ssub.s32 %s17, 1
        %s252 = sand.u32 %s44, 1
        %s253 = scalar_lea.sflag [#allocation3], %s252
        %s254 = sand.u32 %s44, 1
        %s255 = smul.addr %s254, 128
        %s256 = scalar_lea.vmem [#allocation2], %s255
        // Predicated region
        $region37: #{tpu_custom_call.1} parent=35 // pred_check
          %p257 = pneg %p57
        $region38: #{tpu_custom_call.1} parent=35 // pred_check_branch
          %259 = sbr.rel (%p257) target = $region40
        $region39: #{tpu_custom_call.1} parent=35 // pred_region
          %260 = dma.done %s253, 2048
        $region40: #{tpu_custom_call.1} parent=35 // pred_fallthru
          _
        // Predicated region
        $region41: #{tpu_custom_call.1} parent=35 // pred_check
          %p261 = pneg %p78
        $region42: #{tpu_custom_call.1} parent=35 // pred_check_branch
          %263 = sbr.rel (%p261) target = $region44
        $region43: #{tpu_custom_call.1} parent=35 // pred_region
          %264 = dma.done [#allocation6], 2048
        $region44: #{tpu_custom_call.1} parent=35 // pred_fallthru
          _
        // Predicated region
        $region45: #{tpu_custom_call.1} parent=35 // pred_check
          %p265 = pneg %p99
        $region46: #{tpu_custom_call.1} parent=35 // pred_check_branch
          %267 = sbr.rel (%p265) target = $region48
        $region47: #{tpu_custom_call.1} parent=35 // pred_region
          %268 = dma.done [#allocation6], 1024
        $region48: #{tpu_custom_call.1} parent=35 // pred_fallthru
          _
        %s269 = sand.u32 %s44, 1
        %s270 = scalar_lea.sflag [#allocation3], %s269
        %s271 = sand.u32 %s44, 1
        %s272 = smul.addr %s271, 128
        %s273 = scalar_lea.vmem [#allocation2], %s272
        %p274 = pneg %p57
        %p275 = pneg %p54
        %p276 = pneg %p78
        %p277 = pneg %p75
        %p278 = pneg %p99
        %p279 = pneg %p96
        %p280 = pneg %p120
        %p281 = pneg %p117
        %p282 = pneg %p148
        %p283 = pneg %p145
        %s284 = sand.u32 %s135, 1
        %s285 = scalar_lea.sflag [#allocation4], %s284
        %s286 = sand.u32 %s135, 1
        %s287 = smul.addr %s286, 128
        %s288 = scalar_lea.vmem [#allocation8], %s287
        %s289 = smul.u32 2, %s27
        %s290 = smul.u32 2, %s27
        %v292 = vld [vmem:[%s256] sm:$0xff]
        %v293 = vld [vmem:[%s256 + $0x8] sm:$0xff]
        %v294 = vld [vmem:[%s256 + $0x10] sm:$0xff]
        %v295 = vld [vmem:[%s256 + $0x18] sm:$0xff]
        %v296 = vld [vmem:[%s256 + $0x20] sm:$0xff]
        %v297 = vld [vmem:[%s256 + $0x28] sm:$0xff]
        %v298 = vld [vmem:[%s256 + $0x30] sm:$0xff]
        %v299 = vld [vmem:[%s256 + $0x38] sm:$0xff]
        %v300 = vld [vmem:[%s256 + $0x40] sm:$0xff]
        %v301 = vld [vmem:[%s256 + $0x48] sm:$0xff]
        %v302 = vld [vmem:[%s256 + $0x50] sm:$0xff]
        %v303 = vld [vmem:[%s256 + $0x58] sm:$0xff]
        %v304 = vld [vmem:[%s256 + $0x60] sm:$0xff]
        %v305 = vld [vmem:[%s256 + $0x68] sm:$0xff]
        %v306 = vld [vmem:[%s256 + $0x70] sm:$0xff]
        %v307 = vld [vmem:[%s256 + $0x78] sm:$0xff]
        %v308 = vld [vmem:[#allocation5] sm:$0xf]
        %v309 = vld [vmem:[#allocation5 + $0x4] sm:$0xf]
        %v310 = vld [vmem:[#allocation5 + $0x8] sm:$0xf]
        %v311 = vld [vmem:[#allocation5 + $0xc] sm:$0xf]
        %v312 = vld [vmem:[#allocation5 + $0x10] sm:$0xf]
        %v313 = vld [vmem:[#allocation5 + $0x14] sm:$0xf]
        %v314 = vld [vmem:[#allocation5 + $0x18] sm:$0xf]
        %v315 = vld [vmem:[#allocation5 + $0x1c] sm:$0xf]
        %v316 = vld [vmem:[#allocation5 + $0x20] sm:$0xf]
        %v317 = vld [vmem:[#allocation5 + $0x24] sm:$0xf]
        %v318 = vld [vmem:[#allocation5 + $0x28] sm:$0xf]
        %v319 = vld [vmem:[#allocation5 + $0x2c] sm:$0xf]
        %v320 = vld [vmem:[#allocation5 + $0x30] sm:$0xf]
        %v321 = vld [vmem:[#allocation5 + $0x34] sm:$0xf]
        %v322 = vld [vmem:[#allocation5 + $0x38] sm:$0xf]
        %v323 = vld [vmem:[#allocation5 + $0x3c] sm:$0xf]
        %v324 = vld [vmem:[#allocation5 + $0x40] sm:$0xf]
        %v325 = vld [vmem:[#allocation5 + $0x44] sm:$0xf]
        %v326 = vld [vmem:[#allocation5 + $0x48] sm:$0xf]
        %v327 = vld [vmem:[#allocation5 + $0x4c] sm:$0xf]
        %v328 = vld [vmem:[#allocation5 + $0x50] sm:$0xf]
        %v329 = vld [vmem:[#allocation5 + $0x54] sm:$0xf]
        %v330 = vld [vmem:[#allocation5 + $0x58] sm:$0xf]
        %v331 = vld [vmem:[#allocation5 + $0x5c] sm:$0xf]
        %v332 = vld [vmem:[#allocation5 + $0x60] sm:$0xf]
        %v333 = vld [vmem:[#allocation5 + $0x64] sm:$0xf]
        %v334 = vld [vmem:[#allocation5 + $0x68] sm:$0xf]
        %v335 = vld [vmem:[#allocation5 + $0x6c] sm:$0xf]
        %v336 = vld [vmem:[#allocation5 + $0x70] sm:$0xf]
        %v337 = vld [vmem:[#allocation5 + $0x74] sm:$0xf]
        %v338 = vld [vmem:[#allocation5 + $0x78] sm:$0xf]
        %v339 = vld [vmem:[#allocation5 + $0x7c] sm:$0xf]
        %v356 = vunpack.c.l.b16 %v292
        %v357 = vunpack.c.h.b16 %v292
        %v358 = vunpack.c.l.b16 %v293
        %v359 = vunpack.c.h.b16 %v293
        %v360 = vunpack.c.l.b16 %v294
        %v361 = vunpack.c.h.b16 %v294
        %v362 = vunpack.c.l.b16 %v295
        %v363 = vunpack.c.h.b16 %v295
        %v364 = vunpack.c.l.b16 %v296
        %v365 = vunpack.c.h.b16 %v296
        %v366 = vunpack.c.l.b16 %v297
        %v367 = vunpack.c.h.b16 %v297
        %v368 = vunpack.c.l.b16 %v298
        %v369 = vunpack.c.h.b16 %v298
        %v370 = vunpack.c.l.b16 %v299
        %v371 = vunpack.c.h.b16 %v299
        %v372 = vunpack.c.l.b16 %v300
        %v373 = vunpack.c.h.b16 %v300
        %v374 = vunpack.c.l.b16 %v301
        %v375 = vunpack.c.h.b16 %v301
        %v376 = vunpack.c.l.b16 %v302
        %v377 = vunpack.c.h.b16 %v302
        %v378 = vunpack.c.l.b16 %v303
        %v379 = vunpack.c.h.b16 %v303
        %v380 = vunpack.c.l.b16 %v304
        %v381 = vunpack.c.h.b16 %v304
        %v382 = vunpack.c.l.b16 %v305
        %v383 = vunpack.c.h.b16 %v305
        %v384 = vunpack.c.l.b16 %v306
        %v385 = vunpack.c.h.b16 %v306
        %v386 = vunpack.c.l.b16 %v307
        %v387 = vunpack.c.h.b16 %v307
        %v388 = vpack.c.b16 %v358, %v356
        %v389 = vpack.c.b16 %v359, %v357
        %v390 = vpack.c.b16 %v362, %v360
        %v391 = vpack.c.b16 %v363, %v361
        %v392 = vpack.c.b16 %v366, %v364
        %v393 = vpack.c.b16 %v367, %v365
        %v394 = vpack.c.b16 %v370, %v368
        %v395 = vpack.c.b16 %v371, %v369
        %v396 = vpack.c.b16 %v374, %v372
        %v397 = vpack.c.b16 %v375, %v373
        %v398 = vpack.c.b16 %v378, %v376
        %v399 = vpack.c.b16 %v379, %v377
        %v400 = vpack.c.b16 %v382, %v380
        %v401 = vpack.c.b16 %v383, %v381
        %v402 = vpack.c.b16 %v386, %v384
        %v403 = vpack.c.b16 %v387, %v385
        %v452 = vunpack.c.l.b16 %v308
        %v453 = vunpack.c.l.b16 %v309
        %v454 = vunpack.c.l.b16 %v310
        %v455 = vunpack.c.l.b16 %v311
        %v456 = vunpack.c.l.b16 %v312
        %v457 = vunpack.c.l.b16 %v313
        %v458 = vunpack.c.l.b16 %v314
        %v459 = vunpack.c.l.b16 %v315
        %v460 = vunpack.c.l.b16 %v316
        %v461 = vunpack.c.l.b16 %v317
        %v462 = vunpack.c.l.b16 %v318
        %v463 = vunpack.c.l.b16 %v319
        %v464 = vunpack.c.l.b16 %v320
        %v465 = vunpack.c.l.b16 %v321
        %v466 = vunpack.c.l.b16 %v322
        %v467 = vunpack.c.l.b16 %v323
        %v468 = vunpack.c.l.b16 %v324
        %v469 = vunpack.c.l.b16 %v325
        %v470 = vunpack.c.l.b16 %v326
        %v471 = vunpack.c.l.b16 %v327
        %v472 = vunpack.c.l.b16 %v328
        %v473 = vunpack.c.l.b16 %v329
        %v474 = vunpack.c.l.b16 %v330
        %v475 = vunpack.c.l.b16 %v331
        %v476 = vunpack.c.l.b16 %v332
        %v477 = vunpack.c.l.b16 %v333
        %v478 = vunpack.c.l.b16 %v334
        %v479 = vunpack.c.l.b16 %v335
        %v480 = vunpack.c.l.b16 %v336
        %v481 = vunpack.c.l.b16 %v337
        %v482 = vunpack.c.l.b16 %v338
        %v483 = vunpack.c.l.b16 %v339
        %v484 = vpack.c.b16 %v453, %v452
        %v485 = vpack.c.b16 %v455, %v454
        %v486 = vpack.c.b16 %v457, %v456
        %v487 = vpack.c.b16 %v459, %v458
        %v488 = vpack.c.b16 %v461, %v460
        %v489 = vpack.c.b16 %v463, %v462
        %v490 = vpack.c.b16 %v465, %v464
        %v491 = vpack.c.b16 %v467, %v466
        %v492 = vpack.c.b16 %v469, %v468
        %v493 = vpack.c.b16 %v471, %v470
        %v494 = vpack.c.b16 %v473, %v472
        %v495 = vpack.c.b16 %v475, %v474
        %v496 = vpack.c.b16 %v477, %v476
        %v497 = vpack.c.b16 %v479, %v478
        %v498 = vpack.c.b16 %v481, %v480
        %v499 = vpack.c.b16 %v483, %v482
        %516 = vmatprep.subr.bf16.mxu0 0
        %517 = vmatpush1.bf16.msra.mxu0 %v491
        %518 = vmatprep.subr.bf16.mxu0 0
        %519 = vmatpush1.bf16.msra.mxu0 %v490
        %520 = vmatprep.subr.bf16.mxu0 0
        %521 = vmatpush1.bf16.msra.mxu0 %v489
        %522 = vmatprep.subr.bf16.mxu0 0
        %523 = vmatpush1.bf16.msra.mxu0 %v488
        %524 = vmatprep.subr.bf16.mxu0 0
        %525 = vmatpush1.bf16.msra.mxu0 %v487
        %526 = vmatprep.subr.bf16.mxu0 0
        %527 = vmatpush1.bf16.msra.mxu0 %v486
        %528 = vmatprep.subr.bf16.mxu0 0
        %529 = vmatpush1.bf16.msra.mxu0 %v485
        %530 = vmatprep.subr.bf16.mxu0 0
        %531 = vmatpush1.bf16.msra.mxu0 %v484
        %532 = vmatprep.subr.bf16.mxu0 0
        %533 = vmatpush2.bf16.msra.mxu0 %v499
        %534 = vmatprep.subr.bf16.mxu0 0
        %535 = vmatpush2.bf16.msra.mxu0 %v498
        %536 = vmatprep.subr.bf16.mxu0 0
        %537 = vmatpush2.bf16.msra.mxu0 %v497
        %538 = vmatprep.subr.bf16.mxu0 0
        %539 = vmatpush2.bf16.msra.mxu0 %v496
        %540 = vmatprep.subr.bf16.mxu0 0
        %541 = vmatpush2.bf16.msra.mxu0 %v495
        %542 = vmatprep.subr.bf16.mxu0 0
        %543 = vmatpush2.bf16.msra.mxu0 %v494
        %544 = vmatprep.subr.bf16.mxu0 0
        %545 = vmatpush2.bf16.msra.mxu0 %v493
        %546 = vmatprep.subr.bf16.mxu0 0
        %547 = vmatpush2.bf16.msra.mxu0 %v492
        %548 = vmatprep.mubr.bf16.mxu0 %v389
        %549 = vmatmul.mubr.bf16.gmra.mxu0 %v388
        %v550 = vpop.f32.mrf.mxu0
        %v551 = vadd.f32 0.0, %v550
        %v552 = vpop.f32.mrf.mxu0
        %v553 = vpop.f32.mrf.mxu0
        %v554 = vadd.f32 0.0, %v553
        %v555 = vpop.f32.mrf.mxu0
        %556 = vmatprep.mubr.bf16.mxu0 %v391
        %557 = vmatmul.mubr.bf16.gmra.mxu0 %v390
        %v558 = vpop.f32.mrf.mxu0
        %v559 = vadd.f32 0.0, %v558
        %v560 = vpop.f32.mrf.mxu0
        %v561 = vpop.f32.mrf.mxu0
        %v562 = vadd.f32 0.0, %v561
        %v563 = vpop.f32.mrf.mxu0
        %564 = vmatprep.mubr.bf16.mxu0 %v393
        %565 = vmatmul.mubr.bf16.gmra.mxu0 %v392
        %v566 = vpop.f32.mrf.mxu0
        %v567 = vadd.f32 0.0, %v566
        %v568 = vpop.f32.mrf.mxu0
        %v569 = vpop.f32.mrf.mxu0
        %v570 = vadd.f32 0.0, %v569
        %v571 = vpop.f32.mrf.mxu0
        %572 = vmatprep.mubr.bf16.mxu0 %v395
        %573 = vmatmul.mubr.bf16.gmra.mxu0 %v394
        %v574 = vpop.f32.mrf.mxu0
        %v575 = vadd.f32 0.0, %v574
        %v576 = vpop.f32.mrf.mxu0
        %v577 = vpop.f32.mrf.mxu0
        %v578 = vadd.f32 0.0, %v577
        %v579 = vpop.f32.mrf.mxu0
        %580 = vmatprep.mubr.bf16.mxu0 %v397
        %581 = vmatmul.mubr.bf16.gmra.mxu0 %v396
        %v582 = vpop.f32.mrf.mxu0
        %v583 = vadd.f32 0.0, %v582
        %v584 = vpop.f32.mrf.mxu0
        %v585 = vpop.f32.mrf.mxu0
        %v586 = vadd.f32 0.0, %v585
        %v587 = vpop.f32.mrf.mxu0
        %588 = vmatprep.mubr.bf16.mxu0 %v399
        %589 = vmatmul.mubr.bf16.gmra.mxu0 %v398
        %v590 = vpop.f32.mrf.mxu0
        %v591 = vadd.f32 0.0, %v590
        %v592 = vpop.f32.mrf.mxu0
        %v593 = vpop.f32.mrf.mxu0
        %v594 = vadd.f32 0.0, %v593
        %v595 = vpop.f32.mrf.mxu0
        %596 = vmatprep.mubr.bf16.mxu0 %v401
        %597 = vmatmul.mubr.bf16.gmra.mxu0 %v400
        %v598 = vpop.f32.mrf.mxu0
        %v599 = vadd.f32 0.0, %v598
        %v600 = vpop.f32.mrf.mxu0
        %v601 = vpop.f32.mrf.mxu0
        %v602 = vadd.f32 0.0, %v601
        %v603 = vpop.f32.mrf.mxu0
        %604 = vmatprep.mubr.bf16.mxu0 %v403
        %605 = vmatmul.mubr.bf16.gmra.mxu0 %v402
        %v606 = vpop.f32.mrf.mxu0
        %v607 = vadd.f32 0.0, %v606
        %v608 = vpop.f32.mrf.mxu0
        %v609 = vpop.f32.mrf.mxu0
        %v610 = vadd.f32 0.0, %v609
        %v611 = vpop.f32.mrf.mxu0
        %612 = vdwg.mxu0
        %v613 = vmin.f32 %v551, 0.0
        %v614 = vmin.f32 %v554, 0.0
        %v615 = vmin.f32 %v559, 0.0
        %v616 = vmin.f32 %v562, 0.0
        %v617 = vmin.f32 %v567, 0.0
        %v618 = vmin.f32 %v570, 0.0
        %v619 = vmin.f32 %v575, 0.0
        %v620 = vmin.f32 %v578, 0.0
        %v621 = vmin.f32 %v583, 0.0
        %v622 = vmin.f32 %v586, 0.0
        %v623 = vmin.f32 %v591, 0.0
        %v624 = vmin.f32 %v594, 0.0
        %v625 = vmin.f32 %v599, 0.0
        %v626 = vmin.f32 %v602, 0.0
        %v627 = vmin.f32 %v607, 0.0
        %v628 = vmin.f32 %v610, 0.0
        %v629 = vmul.f32 %v613, 1.442695
        %v630 = vpow.pop %v629
        %v631 = vmul.f32 %v614, 1.442695
        %v632 = vpow.pop %v631
        %v633 = vmul.f32 %v615, 1.442695
        %v634 = vpow.pop %v633
        %v635 = vmul.f32 %v616, 1.442695
        %v636 = vpow.pop %v635
        %v637 = vmul.f32 %v617, 1.442695
        %v638 = vpow.pop %v637
        %v639 = vmul.f32 %v618, 1.442695
        %v640 = vpow.pop %v639
        %v641 = vmul.f32 %v619, 1.442695
        %v642 = vpow.pop %v641
        %v643 = vmul.f32 %v620, 1.442695
        %v644 = vpow.pop %v643
        %v645 = vmul.f32 %v621, 1.442695
        %v646 = vpow.pop %v645
        %v647 = vmul.f32 %v622, 1.442695
        %v648 = vpow.pop %v647
        %v649 = vmul.f32 %v623, 1.442695
        %v650 = vpow.pop %v649
        %v651 = vmul.f32 %v624, 1.442695
        %v652 = vpow.pop %v651
        %v653 = vmul.f32 %v625, 1.442695
        %v654 = vpow.pop %v653
        %v655 = vmul.f32 %v626, 1.442695
        %v656 = vpow.pop %v655
        %v657 = vmul.f32 %v627, 1.442695
        %v658 = vpow.pop %v657
        %v659 = vmul.f32 %v628, 1.442695
        %v660 = vpow.pop %v659
        %v661 = vsub.f32 %v630, 1.0
        %v662 = vsub.f32 %v632, 1.0
        %v663 = vsub.f32 %v634, 1.0
        %v664 = vsub.f32 %v636, 1.0
        %v665 = vsub.f32 %v638, 1.0
        %v666 = vsub.f32 %v640, 1.0
        %v667 = vsub.f32 %v642, 1.0
        %v668 = vsub.f32 %v644, 1.0
        %v669 = vsub.f32 %v646, 1.0
        %v670 = vsub.f32 %v648, 1.0
        %v671 = vsub.f32 %v650, 1.0
        %v672 = vsub.f32 %v652, 1.0
        %v673 = vsub.f32 %v654, 1.0
        %v674 = vsub.f32 %v656, 1.0
        %v675 = vsub.f32 %v658, 1.0
        %v676 = vsub.f32 %v660, 1.0
        %v677 = vmul.f32 %v661, 1.6732632
        %v678 = vmul.f32 %v662, 1.6732632
        %v679 = vmul.f32 %v663, 1.6732632
        %v680 = vmul.f32 %v664, 1.6732632
        %v681 = vmul.f32 %v665, 1.6732632
        %v682 = vmul.f32 %v666, 1.6732632
        %v683 = vmul.f32 %v667, 1.6732632
        %v684 = vmul.f32 %v668, 1.6732632
        %v685 = vmul.f32 %v669, 1.6732632
        %v686 = vmul.f32 %v670, 1.6732632
        %v687 = vmul.f32 %v671, 1.6732632
        %v688 = vmul.f32 %v672, 1.6732632
        %v689 = vmul.f32 %v673, 1.6732632
        %v690 = vmul.f32 %v674, 1.6732632
        %v691 = vmul.f32 %v675, 1.6732632
        %v692 = vmul.f32 %v676, 1.6732632
        %vm693 = vcmp.gt.f32.partialorder %v551, 0.0
        %vm694 = vcmp.gt.f32.partialorder %v554, 0.0
        %vm695 = vcmp.gt.f32.partialorder %v559, 0.0
        %vm696 = vcmp.gt.f32.partialorder %v562, 0.0
        %vm697 = vcmp.gt.f32.partialorder %v567, 0.0
        %vm698 = vcmp.gt.f32.partialorder %v570, 0.0
        %vm699 = vcmp.gt.f32.partialorder %v575, 0.0
        %vm700 = vcmp.gt.f32.partialorder %v578, 0.0
        %vm701 = vcmp.gt.f32.partialorder %v583, 0.0
        %vm702 = vcmp.gt.f32.partialorder %v586, 0.0
        %vm703 = vcmp.gt.f32.partialorder %v591, 0.0
        %vm704 = vcmp.gt.f32.partialorder %v594, 0.0
        %vm705 = vcmp.gt.f32.partialorder %v599, 0.0
        %vm706 = vcmp.gt.f32.partialorder %v602, 0.0
        %vm707 = vcmp.gt.f32.partialorder %v607, 0.0
        %vm708 = vcmp.gt.f32.partialorder %v610, 0.0
        %v709 = vsel %vm693, %v551, %v677
        %v710 = vsel %vm694, %v554, %v678
        %v711 = vsel %vm695, %v559, %v679
        %v712 = vsel %vm696, %v562, %v680
        %v713 = vsel %vm697, %v567, %v681
        %v714 = vsel %vm698, %v570, %v682
        %v715 = vsel %vm699, %v575, %v683
        %v716 = vsel %vm700, %v578, %v684
        %v717 = vsel %vm701, %v583, %v685
        %v718 = vsel %vm702, %v586, %v686
        %v719 = vsel %vm703, %v591, %v687
        %v720 = vsel %vm704, %v594, %v688
        %v721 = vsel %vm705, %v599, %v689
        %v722 = vsel %vm706, %v602, %v690
        %v723 = vsel %vm707, %v607, %v691
        %v724 = vsel %vm708, %v610, %v692
        %v725 = vmul.f32 %v709, 1.050701
        %v726 = vmul.f32 %v710, 1.050701
        %v727 = vmul.f32 %v711, 1.050701
        %v728 = vmul.f32 %v712, 1.050701
        %v729 = vmul.f32 %v713, 1.050701
        %v730 = vmul.f32 %v714, 1.050701
        %v731 = vmul.f32 %v715, 1.050701
        %v732 = vmul.f32 %v716, 1.050701
        %v733 = vmul.f32 %v717, 1.050701
        %v734 = vmul.f32 %v718, 1.050701
        %v735 = vmul.f32 %v719, 1.050701
        %v736 = vmul.f32 %v720, 1.050701
        %v737 = vmul.f32 %v721, 1.050701
        %v738 = vmul.f32 %v722, 1.050701
        %v739 = vmul.f32 %v723, 1.050701
        %v740 = vmul.f32 %v724, 1.050701
        %v741 = vpack.c.bf16 %v726, %v725
        %v742 = vpack.c.bf16 %v728, %v727
        %v743 = vpack.c.bf16 %v730, %v729
        %v744 = vpack.c.bf16 %v732, %v731
        %v745 = vpack.c.bf16 %v734, %v733
        %v746 = vpack.c.bf16 %v736, %v735
        %v747 = vpack.c.bf16 %v738, %v737
        %v748 = vpack.c.bf16 %v740, %v739
        %v749 = vld [vmem:[#allocation7] sm:$0xf]
        %v750 = vld [vmem:[#allocation7 + $0x4] sm:$0xf]
        %v751 = vld [vmem:[#allocation7 + $0x8] sm:$0xf]
        %v752 = vld [vmem:[#allocation7 + $0xc] sm:$0xf]
        %v753 = vld [vmem:[#allocation7 + $0x10] sm:$0xf]
        %v754 = vld [vmem:[#allocation7 + $0x14] sm:$0xf]
        %v755 = vld [vmem:[#allocation7 + $0x18] sm:$0xf]
        %v756 = vld [vmem:[#allocation7 + $0x1c] sm:$0xf]
        %v757 = vld [vmem:[#allocation7 + $0x20] sm:$0xf]
        %v758 = vld [vmem:[#allocation7 + $0x24] sm:$0xf]
        %v759 = vld [vmem:[#allocation7 + $0x28] sm:$0xf]
        %v760 = vld [vmem:[#allocation7 + $0x2c] sm:$0xf]
        %v761 = vld [vmem:[#allocation7 + $0x30] sm:$0xf]
        %v762 = vld [vmem:[#allocation7 + $0x34] sm:$0xf]
        %v763 = vld [vmem:[#allocation7 + $0x38] sm:$0xf]
        %v764 = vld [vmem:[#allocation7 + $0x3c] sm:$0xf]
        %v765 = vld [vmem:[%s3] sm:$0x1]
        %v767 = vlaneseq
        %v768 = vshrl.u32 %v767, 7
        %v769 = vsub.s32 0, %v768
        %v770 = vrot.slane %v765, %v769
        %v788 = vunpack.c.l.b16 %v749
        %v789 = vunpack.c.l.b16 %v750
        %v790 = vunpack.c.l.b16 %v751
        %v791 = vunpack.c.l.b16 %v752
        %v792 = vunpack.c.l.b16 %v753
        %v793 = vunpack.c.l.b16 %v754
        %v794 = vunpack.c.l.b16 %v755
        %v795 = vunpack.c.l.b16 %v756
        %v796 = vunpack.c.l.b16 %v757
        %v797 = vunpack.c.l.b16 %v758
        %v798 = vunpack.c.l.b16 %v759
        %v799 = vunpack.c.l.b16 %v760
        %v800 = vunpack.c.l.b16 %v761
        %v801 = vunpack.c.l.b16 %v762
        %v802 = vunpack.c.l.b16 %v763
        %v803 = vunpack.c.l.b16 %v764
        %v804 = vpack.c.b16 %v789, %v788
        %v805 = vpack.c.b16 %v791, %v790
        %v806 = vpack.c.b16 %v793, %v792
        %v807 = vpack.c.b16 %v795, %v794
        %v808 = vpack.c.b16 %v797, %v796
        %v809 = vpack.c.b16 %v799, %v798
        %v810 = vpack.c.b16 %v801, %v800
        %v811 = vpack.c.b16 %v803, %v802
        %820 = vmatprep.subr.bf16.mxu0 0
        %821 = vmatpush1.bf16.msra.mxu0 %v811
        %822 = vmatprep.subr.bf16.mxu0 0
        %823 = vmatpush1.bf16.msra.mxu0 %v810
        %824 = vmatprep.subr.bf16.mxu0 0
        %825 = vmatpush1.bf16.msra.mxu0 %v809
        %826 = vmatprep.subr.bf16.mxu0 0
        %827 = vmatpush1.bf16.msra.mxu0 %v808
        %828 = vmatprep.subr.bf16.mxu0 0
        %829 = vmatpush1.bf16.msra.mxu0 %v807
        %830 = vmatprep.subr.bf16.mxu0 0
        %831 = vmatpush1.bf16.msra.mxu0 %v806
        %832 = vmatprep.subr.bf16.mxu0 0
        %833 = vmatpush1.bf16.msra.mxu0 %v805
        %834 = vmatprep.subr.bf16.mxu0 0
        %835 = vmatpush1.bf16.msra.mxu0 %v804
        %836 = vmatprep.subr.bf16.mxu0 0
        %837 = vmatpush2.bf16.msra.mxu0 0
        %838 = vmatprep.subr.bf16.mxu0 0
        %839 = vmatpush2.bf16.msra.mxu0 0
        %840 = vmatprep.subr.bf16.mxu0 0
        %841 = vmatpush2.bf16.msra.mxu0 0
        %842 = vmatprep.subr.bf16.mxu0 0
        %843 = vmatpush2.bf16.msra.mxu0 0
        %844 = vmatprep.subr.bf16.mxu0 0
        %845 = vmatpush2.bf16.msra.mxu0 0
        %846 = vmatprep.subr.bf16.mxu0 0
        %847 = vmatpush2.bf16.msra.mxu0 0
        %848 = vmatprep.subr.bf16.mxu0 0
        %849 = vmatpush2.bf16.msra.mxu0 0
        %850 = vmatprep.subr.bf16.mxu0 0
        %851 = vmatpush2.bf16.msra.mxu0 0
        %852 = vmatprep.mubr.bf16.mxu0 0
        %853 = vmatmul.mubr.bf16.gmra.mxu0 %v741
        %v854 = vpop.f32.mrf.mxu0
        %v855 = vadd.f32 %v770, %v854
        %v856 = vpop.f32.mrf.mxu0
        %v857 = vpop.f32.mrf.mxu0
        %v858 = vadd.f32 %v770, %v857
        %v859 = vpop.f32.mrf.mxu0
        %860 = vmatprep.mubr.bf16.mxu0 0
        %861 = vmatmul.mubr.bf16.gmra.mxu0 %v742
        %v862 = vpop.f32.mrf.mxu0
        %v863 = vadd.f32 %v770, %v862
        %v864 = vpop.f32.mrf.mxu0
        %v865 = vpop.f32.mrf.mxu0
        %v866 = vadd.f32 %v770, %v865
        %v867 = vpop.f32.mrf.mxu0
        %868 = vmatprep.mubr.bf16.mxu0 0
        %869 = vmatmul.mubr.bf16.gmra.mxu0 %v743
        %v870 = vpop.f32.mrf.mxu0
        %v871 = vadd.f32 %v770, %v870
        %v872 = vpop.f32.mrf.mxu0
        %v873 = vpop.f32.mrf.mxu0
        %v874 = vadd.f32 %v770, %v873
        %v875 = vpop.f32.mrf.mxu0
        %876 = vmatprep.mubr.bf16.mxu0 0
        %877 = vmatmul.mubr.bf16.gmra.mxu0 %v744
        %v878 = vpop.f32.mrf.mxu0
        %v879 = vadd.f32 %v770, %v878
        %v880 = vpop.f32.mrf.mxu0
        %v881 = vpop.f32.mrf.mxu0
        %v882 = vadd.f32 %v770, %v881
        %v883 = vpop.f32.mrf.mxu0
        %884 = vmatprep.mubr.bf16.mxu0 0
        %885 = vmatmul.mubr.bf16.gmra.mxu0 %v745
        %v886 = vpop.f32.mrf.mxu0
        %v887 = vadd.f32 %v770, %v886
        %v888 = vpop.f32.mrf.mxu0
        %v889 = vpop.f32.mrf.mxu0
        %v890 = vadd.f32 %v770, %v889
        %v891 = vpop.f32.mrf.mxu0
        %892 = vmatprep.mubr.bf16.mxu0 0
        %893 = vmatmul.mubr.bf16.gmra.mxu0 %v746
        %v894 = vpop.f32.mrf.mxu0
        %v895 = vadd.f32 %v770, %v894
        %v896 = vpop.f32.mrf.mxu0
        %v897 = vpop.f32.mrf.mxu0
        %v898 = vadd.f32 %v770, %v897
        %v899 = vpop.f32.mrf.mxu0
        %900 = vmatprep.mubr.bf16.mxu0 0
        %901 = vmatmul.mubr.bf16.gmra.mxu0 %v747
        %v902 = vpop.f32.mrf.mxu0
        %v903 = vadd.f32 %v770, %v902
        %v904 = vpop.f32.mrf.mxu0
        %v905 = vpop.f32.mrf.mxu0
        %v906 = vadd.f32 %v770, %v905
        %v907 = vpop.f32.mrf.mxu0
        %908 = vmatprep.mubr.bf16.mxu0 0
        %909 = vmatmul.mubr.bf16.gmra.mxu0 %v748
        %v910 = vpop.f32.mrf.mxu0
        %v911 = vadd.f32 %v770, %v910
        %v912 = vpop.f32.mrf.mxu0
        %v913 = vpop.f32.mrf.mxu0
        %v914 = vadd.f32 %v770, %v913
        %v915 = vpop.f32.mrf.mxu0
        %916 = vdwg.mxu0
        %v917 = vmul.f32 %v855, 0.8
        %v918 = vmul.f32 %v858, 0.8
        %v919 = vmul.f32 %v863, 0.8
        %v920 = vmul.f32 %v866, 0.8
        %v921 = vmul.f32 %v871, 0.8
        %v922 = vmul.f32 %v874, 0.8
        %v923 = vmul.f32 %v879, 0.8
        %v924 = vmul.f32 %v882, 0.8
        %v925 = vmul.f32 %v887, 0.8
        %v926 = vmul.f32 %v890, 0.8
        %v927 = vmul.f32 %v895, 0.8
        %v928 = vmul.f32 %v898, 0.8
        %v929 = vmul.f32 %v903, 0.8
        %v930 = vmul.f32 %v906, 0.8
        %v931 = vmul.f32 %v911, 0.8
        %v932 = vmul.f32 %v914, 0.8
        %v933 = vmul.f32 %v855, 0.2
        %v934 = vmul.f32 %v858, 0.2
        %v935 = vmul.f32 %v863, 0.2
        %v936 = vmul.f32 %v866, 0.2
        %v937 = vmul.f32 %v871, 0.2
        %v938 = vmul.f32 %v874, 0.2
        %v939 = vmul.f32 %v879, 0.2
        %v940 = vmul.f32 %v882, 0.2
        %v941 = vmul.f32 %v887, 0.2
        %v942 = vmul.f32 %v890, 0.2
        %v943 = vmul.f32 %v895, 0.2
        %v944 = vmul.f32 %v898, 0.2
        %v945 = vmul.f32 %v903, 0.2
        %v946 = vmul.f32 %v906, 0.2
        %v947 = vadd.f32 %v917, %v933
        %v948 = vadd.f32 %v918, %v934
        %v949 = vadd.f32 %v919, %v933
        %v950 = vadd.f32 %v920, %v934
        %v951 = vadd.f32 %v921, %v935
        %v952 = vadd.f32 %v922, %v936
        %v953 = vadd.f32 %v923, %v937
        %v954 = vadd.f32 %v924, %v938
        %v955 = vadd.f32 %v925, %v939
        %v956 = vadd.f32 %v926, %v940
        %v957 = vadd.f32 %v927, %v941
        %v958 = vadd.f32 %v928, %v942
        %v959 = vadd.f32 %v929, %v943
        %v960 = vadd.f32 %v930, %v944
        %v961 = vadd.f32 %v931, %v945
        %v962 = vadd.f32 %v932, %v946
        %v963 = vsel 1, %v855, %v947
        %v964 = vsel 1, %v858, %v948
        %v965 = vsel 0, %v863, %v949
        %v966 = vsel 0, %v866, %v950
        %v967 = vsel 0, %v871, %v951
        %v968 = vsel 0, %v874, %v952
        %v969 = vsel 0, %v879, %v953
        %v970 = vsel 0, %v882, %v954
        %v971 = vsel 0, %v887, %v955
        %v972 = vsel 0, %v890, %v956
        %v973 = vsel 0, %v895, %v957
        %v974 = vsel 0, %v898, %v958
        %v975 = vsel 0, %v903, %v959
        %v976 = vsel 0, %v906, %v960
        %v977 = vsel 0, %v911, %v961
        %v978 = vsel 0, %v914, %v962
        %v979 = vmin.f32 %v963, 0.0
        %v980 = vmin.f32 %v964, 0.0
        %v981 = vmin.f32 %v965, 0.0
        %v982 = vmin.f32 %v966, 0.0
        %v983 = vmin.f32 %v967, 0.0
        %v984 = vmin.f32 %v968, 0.0
        %v985 = vmin.f32 %v969, 0.0
        %v986 = vmin.f32 %v970, 0.0
        %v987 = vmin.f32 %v971, 0.0
        %v988 = vmin.f32 %v972, 0.0
        %v989 = vmin.f32 %v973, 0.0
        %v990 = vmin.f32 %v974, 0.0
        %v991 = vmin.f32 %v975, 0.0
        %v992 = vmin.f32 %v976, 0.0
        %v993 = vmin.f32 %v977, 0.0
        %v994 = vmin.f32 %v978, 0.0
        %v995 = vmul.f32 %v979, 1.442695
        %v996 = vpow.pop %v995
        %v997 = vmul.f32 %v980, 1.442695
        %v998 = vpow.pop %v997
        %v999 = vmul.f32 %v981, 1.442695
        %v1000 = vpow.pop %v999
        %v1001 = vmul.f32 %v982, 1.442695
        %v1002 = vpow.pop %v1001
        %v1003 = vmul.f32 %v983, 1.442695
        %v1004 = vpow.pop %v1003
        %v1005 = vmul.f32 %v984, 1.442695
        %v1006 = vpow.pop %v1005
        %v1007 = vmul.f32 %v985, 1.442695
        %v1008 = vpow.pop %v1007
        %v1009 = vmul.f32 %v986, 1.442695
        %v1010 = vpow.pop %v1009
        %v1011 = vmul.f32 %v987, 1.442695
        %v1012 = vpow.pop %v1011
        %v1013 = vmul.f32 %v988, 1.442695
        %v1014 = vpow.pop %v1013
        %v1015 = vmul.f32 %v989, 1.442695
        %v1016 = vpow.pop %v1015
        %v1017 = vmul.f32 %v990, 1.442695
        %v1018 = vpow.pop %v1017
        %v1019 = vmul.f32 %v991, 1.442695
        %v1020 = vpow.pop %v1019
        %v1021 = vmul.f32 %v992, 1.442695
        %v1022 = vpow.pop %v1021
        %v1023 = vmul.f32 %v993, 1.442695
        %v1024 = vpow.pop %v1023
        %v1025 = vmul.f32 %v994, 1.442695
        %v1026 = vpow.pop %v1025
        %v1027 = vsub.f32 %v996, 1.0
        %v1028 = vsub.f32 %v998, 1.0
        %v1029 = vsub.f32 %v1000, 1.0
        %v1030 = vsub.f32 %v1002, 1.0
        %v1031 = vsub.f32 %v1004, 1.0
        %v1032 = vsub.f32 %v1006, 1.0
        %v1033 = vsub.f32 %v1008, 1.0
        %v1034 = vsub.f32 %v1010, 1.0
        %v1035 = vsub.f32 %v1012, 1.0
        %v1036 = vsub.f32 %v1014, 1.0
        %v1037 = vsub.f32 %v1016, 1.0
        %v1038 = vsub.f32 %v1018, 1.0
        %v1039 = vsub.f32 %v1020, 1.0
        %v1040 = vsub.f32 %v1022, 1.0
        %v1041 = vsub.f32 %v1024, 1.0
        %v1042 = vsub.f32 %v1026, 1.0
        %v1043 = vmul.f32 %v1027, 1.6732632
        %v1044 = vmul.f32 %v1028, 1.6732632
        %v1045 = vmul.f32 %v1029, 1.6732632
        %v1046 = vmul.f32 %v1030, 1.6732632
        %v1047 = vmul.f32 %v1031, 1.6732632
        %v1048 = vmul.f32 %v1032, 1.6732632
        %v1049 = vmul.f32 %v1033, 1.6732632
        %v1050 = vmul.f32 %v1034, 1.6732632
        %v1051 = vmul.f32 %v1035, 1.6732632
        %v1052 = vmul.f32 %v1036, 1.6732632
        %v1053 = vmul.f32 %v1037, 1.6732632
        %v1054 = vmul.f32 %v1038, 1.6732632
        %v1055 = vmul.f32 %v1039, 1.6732632
        %v1056 = vmul.f32 %v1040, 1.6732632
        %v1057 = vmul.f32 %v1041, 1.6732632
        %v1058 = vmul.f32 %v1042, 1.6732632
        %vm1059 = vcmp.gt.f32.partialorder %v963, 0.0
        %vm1060 = vcmp.gt.f32.partialorder %v964, 0.0
        %vm1061 = vcmp.gt.f32.partialorder %v965, 0.0
        %vm1062 = vcmp.gt.f32.partialorder %v966, 0.0
        %vm1063 = vcmp.gt.f32.partialorder %v967, 0.0
        %vm1064 = vcmp.gt.f32.partialorder %v968, 0.0
        %vm1065 = vcmp.gt.f32.partialorder %v969, 0.0
        %vm1066 = vcmp.gt.f32.partialorder %v970, 0.0
        %vm1067 = vcmp.gt.f32.partialorder %v971, 0.0
        %vm1068 = vcmp.gt.f32.partialorder %v972, 0.0
        %vm1069 = vcmp.gt.f32.partialorder %v973, 0.0
        %vm1070 = vcmp.gt.f32.partialorder %v974, 0.0
        %vm1071 = vcmp.gt.f32.partialorder %v975, 0.0
        %vm1072 = vcmp.gt.f32.partialorder %v976, 0.0
        %vm1073 = vcmp.gt.f32.partialorder %v977, 0.0
        %vm1074 = vcmp.gt.f32.partialorder %v978, 0.0
        %v1075 = vsel %vm1059, %v963, %v1043
        %v1076 = vsel %vm1060, %v964, %v1044
        %v1077 = vsel %vm1061, %v965, %v1045
        %v1078 = vsel %vm1062, %v966, %v1046
        %v1079 = vsel %vm1063, %v967, %v1047
        %v1080 = vsel %vm1064, %v968, %v1048
        %v1081 = vsel %vm1065, %v969, %v1049
        %v1082 = vsel %vm1066, %v970, %v1050
        %v1083 = vsel %vm1067, %v971, %v1051
        %v1084 = vsel %vm1068, %v972, %v1052
        %v1085 = vsel %vm1069, %v973, %v1053
        %v1086 = vsel %vm1070, %v974, %v1054
        %v1087 = vsel %vm1071, %v975, %v1055
        %v1088 = vsel %vm1072, %v976, %v1056
        %v1089 = vsel %vm1073, %v977, %v1057
        %v1090 = vsel %vm1074, %v978, %v1058
        %v1091 = vmul.f32 %v1075, 1.050701
        %v1092 = vmul.f32 %v1076, 1.050701
        %v1093 = vmul.f32 %v1077, 1.050701
        %v1094 = vmul.f32 %v1078, 1.050701
        %v1095 = vmul.f32 %v1079, 1.050701
        %v1096 = vmul.f32 %v1080, 1.050701
        %v1097 = vmul.f32 %v1081, 1.050701
        %v1098 = vmul.f32 %v1082, 1.050701
        %v1099 = vmul.f32 %v1083, 1.050701
        %v1100 = vmul.f32 %v1084, 1.050701
        %v1101 = vmul.f32 %v1085, 1.050701
        %v1102 = vmul.f32 %v1086, 1.050701
        %v1103 = vmul.f32 %v1087, 1.050701
        %v1104 = vmul.f32 %v1088, 1.050701
        %v1105 = vmul.f32 %v1089, 1.050701
        %v1106 = vmul.f32 %v1090, 1.050701
        %1107 = vst [vmem:[%s288] sm:$0xff] %v1091
        %1108 = vst [vmem:[%s288 + $0x8] sm:$0xff] %v1092
        %1109 = vst [vmem:[%s288 + $0x10] sm:$0xff] %v1093
        %1110 = vst [vmem:[%s288 + $0x18] sm:$0xff] %v1094
        %1111 = vst [vmem:[%s288 + $0x20] sm:$0xff] %v1095
        %1112 = vst [vmem:[%s288 + $0x28] sm:$0xff] %v1096
        %1113 = vst [vmem:[%s288 + $0x30] sm:$0xff] %v1097
        %1114 = vst [vmem:[%s288 + $0x38] sm:$0xff] %v1098
        %1115 = vst [vmem:[%s288 + $0x40] sm:$0xff] %v1099
        %1116 = vst [vmem:[%s288 + $0x48] sm:$0xff] %v1100
        %1117 = vst [vmem:[%s288 + $0x50] sm:$0xff] %v1101
        %1118 = vst [vmem:[%s288 + $0x58] sm:$0xff] %v1102
        %1119 = vst [vmem:[%s288 + $0x60] sm:$0xff] %v1103
        %1120 = vst [vmem:[%s288 + $0x68] sm:$0xff] %v1104
        %1121 = vst [vmem:[%s288 + $0x70] sm:$0xff] %v1105
        %1122 = vst [vmem:[%s288 + $0x78] sm:$0xff] %v1106
        %s1123 = sand.u32 %s135, 1
        %s1124 = scalar_lea.sflag [#allocation4], %s1123
        %s1125 = sand.u32 %s135, 1
        %s1126 = smul.addr %s1125, 128
        %s1127 = scalar_lea.vmem [#allocation8], %s1126
        // Predicated region
        $region49: #{tpu_custom_call.1} parent=35 // pred_check
          %p1128 = pneg %p145
        $region50: #{tpu_custom_call.1} parent=35 // pred_check_branch
          %1130 = sbr.rel (%p1128) target = $region52
        $region51: #{tpu_custom_call.1} parent=35 // pred_region
          #allocation12 [shape = 'u32[6]{0}', space=smem, size = 0x18, scoped, tag = 'DMA stride descriptor']
          %s1131 = smul.u32 2, %s27
          %s1133 = ssub.s32 2048, 2048
          %1134 = vsyncadd %s1124, %s1133
          %s1135 = smul.addr %s26, 32
          %s1136 = sadd.s32 %s1131, %s1135
          %s1137 = smul.addr %s1136, 128
          %s1138 = scalar_lea.hbm %s4, %s1137
          %s1140 = sshll.u32 1, 14
          %s1141 = sxor.u32 4294967295, %s1140
          %s1144 = sshll.u32 7, 18
          %s1145 = sxor.u32 4294967295, %s1144
          %s1146 = sand.u32 0, %s1145
          %s1148 = sor.u32 %s1146, 0
          %s1149 = sshll.u32 %s1127, 4
          %s1150 = int_to_ptr.vmem [resolvable:$true] %s1149
          %1156 = sst [smem:[#allocation12]] 256
          %s1157 = scalar_lea.smem [#allocation12], 1
          %1158 = sst [smem:[%s1157]] 512
          %s1159 = scalar_lea.smem [#allocation12], 2
          %1160 = sst [smem:[%s1159]] 2
          %s1161 = scalar_lea.smem [#allocation12], 3
          %1162 = sst [smem:[%s1161]] 128
          %s1163 = scalar_lea.smem [#allocation12], 4
          %1164 = sst [smem:[%s1163]] 128
          %s1165 = scalar_lea.smem [#allocation12], 5
          %1166 = sst [smem:[%s1165]] 8
          %1168 = dma.general %s1150, 2048, %s1138, %s1124, 131072, [#allocation12], %s1148, 0
        $region52: #{tpu_custom_call.1} parent=35 // pred_fallthru
          _
      $region36: #{tpu_custom_call.1} parent=5 // pred_fallthru
        _
      %p1169 = scmp.le.s32.totalorder 2, %s17
      // Predicated region
      $region53: #{tpu_custom_call.1} parent=5 // pred_check
        %p1170 = pneg %p1169
      $region54: #{tpu_custom_call.1} parent=5 // pred_check_branch
        %1172 = sbr.rel (%p1170) target = $region56
      $region55: #{tpu_custom_call.1} parent=5 // pred_region
        %s1173 = ssub.s32 %s17, 2
        // Predicated region
        $region57: #{tpu_custom_call.1} parent=55 // pred_check
          %p1174 = pneg %p151
        $region58: #{tpu_custom_call.1} parent=55 // pred_check_branch
          %1176 = sbr.rel (%p1174) target = $region60
        $region59: #{tpu_custom_call.1} parent=55 // pred_region
          %s1177 = sand.u32 %s136, 1
          %s1178 = scalar_lea.sflag [#allocation4], %s1177
          %s1179 = sand.u32 %s136, 1
          %s1180 = smul.addr %s1179, 128
          %s1181 = scalar_lea.vmem [#allocation8], %s1180
          %1182 = dma.done %s1178, 2048
        $region60: #{tpu_custom_call.1} parent=55 // pred_fallthru
          _
      $region56: #{tpu_custom_call.1} parent=5 // pred_fallthru
        _
    $region6: #{tpu_custom_call.1} parent=1 // loop_footer
      %s21 = sadd.s32 1, %s17
    $region7: #{tpu_custom_call.1} parent=1 // loop_footer_branch
      %16 = sbr.rel target = $region3
    $region8: #{tpu_custom_call.1} parent=1 // loop_exit
      _
    %1183 = vsyncpa [#allocation3], 1
    %s1184 = scalar_lea.sflag [#allocation3], 1
    %1185 = vsyncpa %s1184, 1
    %1186 = vsyncpa [#allocation6], 1
    %1187 = vsyncpa [#allocation4], 1
    %s1188 = scalar_lea.sflag [#allocation4], 1
    %1189 = vsyncpa %s1188, 1

</llo_original>
